<compile_context>
chip_gen: v7x
topology: tpu7x:2x2x1
jax: 0.10.0
libtpu: 0.0.40
codegen_flags: <defaults>
</compile_context>

<pallas_src>
import jax
import jax.numpy as jnp
from jax.experimental import pallas as pl
from jax.experimental.pallas import tpu as pltpu


def _masked_msa_kernel(x_ref, w_ref, b_ref, o_ref):
    # x_ref: (TM, C_m)        streamed tile of flattened MSA rows
    # w_ref: (C_m, C_out_pad) resident weight (torch layout already transposed)
    # b_ref: (1, C_out_pad)   resident f32 bias
    # o_ref: (TM, C_out_pad)  lane-dense output tile
    acc = jnp.dot(x_ref[...], w_ref[...], preferred_element_type=jnp.float32)
    o_ref[...] = (acc + b_ref[...]).astype(o_ref.dtype)


def _round_up(x, m):
    return ((x + m - 1) // m) * m


def _choose_tile_m(M, default_tile):
    """Large row tile for HBM-bound streaming, but keep >=2 grid blocks."""
    if M >= 2 * default_tile:
        return default_tile
    half = _round_up(pl.cdiv(M, 2), 8)          # sublane-aligned
    return max(min(half, default_tile), 8)


def masked_msa_head(m, weight, bias, *, tile_m=1024):
    """
    Args:
        m:      [*, N_seq, N_res, C_m]   MSA embedding
        weight: [C_out, C_m]             (PyTorch nn.Linear layout)
        bias:   [C_out]
    Returns:
        [*, N_seq, N_res, C_out]
    """
    c_out, c_m = weight.shape
    lead_shape = m.shape[:-1]
    M = 1
    for d in lead_shape:
        M *= d

    x = m.reshape(M, c_m)

    # Lane-pad the (tiny) output channel dim to a multiple of 128 so stores
    # are unmasked and writeback DMA is contiguous.  Padding lives only on
    # the resident weight/bias, never on the streamed x.
    c_out_pad = _round_up(c_out, 128)
    w_t = jnp.zeros((c_m, c_out_pad), dtype=m.dtype).at[:, :c_out].set(
        weight.T.astype(m.dtype))
    b2 = jnp.zeros((1, c_out_pad), dtype=jnp.float32).at[:, :c_out].set(
        bias.astype(jnp.float32))

    tm = _choose_tile_m(M, tile_m)
    grid = (pl.cdiv(M, tm),)        # ragged last block handled by Pallas masking

    itemsize = jnp.dtype(m.dtype).itemsize
    cost = pl.CostEstimate(
        flops=2 * M * c_m * c_out_pad,
        transcendentals=0,
        bytes_accessed=(M * c_m + M * c_out_pad + c_m * c_out_pad) * itemsize
        + c_out_pad * 4,
    )

    # VMEM budget: double-buffered x tile + double-buffered out tile +
    # resident weight/bias.  Cap below v7x's 64 MiB physical VMEM.
    vmem_need = (2 * tm * c_m * itemsize
                 + 2 * tm * c_out_pad * itemsize
                 + c_m * c_out_pad * itemsize
                 + c_out_pad * 4)
    vmem_limit = int(min(max(2 * vmem_need, 16 * 1024 * 1024),
                         48 * 1024 * 1024))

    out = pl.pallas_call(
        _masked_msa_kernel,
        out_shape=jax.ShapeDtypeStruct((M, c_out_pad), m.dtype),
        grid=grid,
        in_specs=[
            pl.BlockSpec((tm, c_m), lambda i: (i, 0)),         # streamed x
            pl.BlockSpec((c_m, c_out_pad), lambda i: (0, 0)),  # resident W^T
            pl.BlockSpec((1, c_out_pad), lambda i: (0, 0)),    # resident bias
        ],
        out_specs=pl.BlockSpec((tm, c_out_pad), lambda i: (i, 0)),
        compiler_params=pltpu.CompilerParams(
            dimension_semantics=("parallel",),
            vmem_limit_bytes=vmem_limit),
        cost_estimate=cost,
    )(x, w_t, b2)

    # Drop the lane padding (cheap: output is tiny vs the x read).
    return out[:, :c_out].reshape(*lead_shape, c_out)


if __name__ == "__main__":
    key = jax.random.PRNGKey(0)
    k_m, k_w, k_b, k_m2 = jax.random.split(key, 4)

    # Small shapes consistent with the module's forward: m: [batch, N_seq, N_res, C_m]
    batch, n_seq, n_res = 2, 8, 16
    c_m, c_out = 32, 23

    m = jax.random.normal(k_m, (batch, n_seq, n_res, c_m), dtype=jnp.float32)

    # NOTE: the real module uses init='final' (zeros).  Deterministic random
    # params give a non-trivial output; forward semantics (y = m @ W^T + b
    # over the last dim) are identical.
    weight = 0.02 * jax.random.normal(k_w, (c_out, c_m), dtype=jnp.float32)
    bias = 0.01 * jax.random.normal(k_b, (c_out,), dtype=jnp.float32)

    logits = masked_msa_head(m, weight, bias)
    logits = jax.block_until_ready(logits)

    ref = jnp.einsum("bsrc,oc->bsro", m, weight) + bias
    assert logits.shape == (batch, n_seq, n_res, c_out), logits.shape
    assert jnp.allclose(logits, ref, atol=2e-5, rtol=2e-5), "mismatch vs reference"

    # Second check: leading dims that do NOT divide the row tile (exercises the
    # pad-free ragged last block path).
    m2 = jax.random.normal(k_m2, (2, 7, 17, c_m), dtype=jnp.float32)
    logits2 = jax.block_until_ready(masked_msa_head(m2, weight, bias))
    ref2 = jnp.einsum("bsrc,oc->bsro", m2, weight) + bias
    assert logits2.shape == (2, 7, 17, c_out), logits2.shape
    assert jnp.allclose(logits2, ref2, atol=2e-5, rtol=2e-5), "ragged mismatch"

    print("KERNEL_OK")
</pallas_src>

<mosaic_0001>
module attributes {stable_mosaic.version = 11 : i64} {
  func.func @_masked_msa_kernel(%arg0: i32, %arg1: memref<128x32xf32, #tpu.memory_space<vmem>>, %arg2: memref<32x128xf32, #tpu.memory_space<vmem>>, %arg3: memref<1x128xf32, #tpu.memory_space<vmem>>, %arg4: memref<128x128xf32, #tpu.memory_space<vmem>>) attributes {dimension_semantics = [#tpu.dimension_semantics<parallel>], iteration_bounds = array<i64: 2>, scalar_prefetch = 0 : i64, scratch_operands = 0 : i64, tpu.core_type = #tpu.core_type<tc>, window_params = [{transform_indices = @transform_0, window_bounds = array<i64: 128, 32>}, {pipeline_mode = #tpu.pipeline_mode<synchronous>, transform_indices = @transform_1, window_bounds = array<i64: 32, 128>}, {pipeline_mode = #tpu.pipeline_mode<synchronous>, transform_indices = @transform_2, window_bounds = array<i64: 1, 128>}, {transform_indices = @transform_3, window_bounds = array<i64: 128, 128>}]} {
    %c0 = arith.constant 0 : index
    %c0_0 = arith.constant 0 : index
    %0 = vector.load %arg1[%c0, %c0_0] : memref<128x32xf32, #tpu.memory_space<vmem>>, vector<128x32xf32>
    %c0_1 = arith.constant 0 : index
    %c0_2 = arith.constant 0 : index
    %1 = vector.load %arg2[%c0_1, %c0_2] : memref<32x128xf32, #tpu.memory_space<vmem>>, vector<32x128xf32>
    %cst = arith.constant dense<0.000000e+00> : vector<128x128xf32>
    %2 = tpu.matmul %0, %1, %cst {dimension_numbers = #tpu.dot_dimension_numbers<[1], [0], [0], [1], [0, 0, 1, 1], [], []>} : vector<128x32xf32>, vector<32x128xf32>, vector<128x128xf32> -> vector<128x128xf32>
    %c0_3 = arith.constant 0 : index
    %c0_4 = arith.constant 0 : index
    %3 = vector.load %arg3[%c0_3, %c0_4] : memref<1x128xf32, #tpu.memory_space<vmem>>, vector<1x128xf32>
    %4 = vector.broadcast %3 : vector<1x128xf32> to vector<128x128xf32>
    %5 = arith.addf %2, %4 : vector<128x128xf32>
    %c0_5 = arith.constant 0 : index
    %c0_6 = arith.constant 0 : index
    %6 = vector.load %arg4[%c0_5, %c0_6] : memref<128x128xf32, #tpu.memory_space<vmem>>, vector<128x128xf32>
    tpu.vector_store %arg4[%c0_5, %c0_6], %5 {strides = array<i32>} : memref<128x128xf32, #tpu.memory_space<vmem>>, vector<128x128xf32>,
    return
  }
  func.func @transform_0(%arg0: i32) -> (i32, i32) {
    %c0_i32 = arith.constant 0 : i32
    %c0_i32_0 = arith.constant 0 : i32
    return %arg0, %c0_i32 : i32, i32
  }
  func.func @transform_1(%arg0: i32) -> (i32, i32) {
    %c0_i32 = arith.constant 0 : i32
    %c0_i32_0 = arith.constant 0 : i32
    %c0_i32_1 = arith.constant 0 : i32
    return %c0_i32, %c0_i32_0 : i32, i32
  }
  func.func @transform_2(%arg0: i32) -> (i32, i32) {
    %c0_i32 = arith.constant 0 : i32
    %c0_i32_0 = arith.constant 0 : i32
    %c0_i32_1 = arith.constant 0 : i32
    return %c0_i32, %c0_i32_0 : i32, i32
  }
  func.func @transform_3(%arg0: i32) -> (i32, i32) {
    %c0_i32 = arith.constant 0 : i32
    %c0_i32_0 = arith.constant 0 : i32
    return %arg0, %c0_i32 : i32, i32
  }
}

</mosaic_0001>

<llo_original>
// kernel: tpu_custom_call.1
$region0: #{tpu_custom_call.1}
  #allocation0 [shape = 'u32[]', space=smem, size = 0x4, offset = 0x4, fixed_abs, tag = 'smem constant byte address 0x4 - core index']
  #allocation1 [shape = 'u32[144,128]{1,0:T(1,128)}', space=vmem, size = 0x12000, scoped, tag = 'internal scratch']
  %s0 = inlined_call_operand.vmem [shape: f32[256,32], index: 0, kind: input, shape index: {}]
  %s1 = inlined_call_operand.vmem [shape: f32[32,128], index: 1, kind: input, shape index: {}]
  %s2 = inlined_call_operand.vmem [shape: f32[1,128], index: 2, kind: input, shape index: {}]
  %s3 = inlined_call_operand.hbm [shape: f32[256,128], index: 3, kind: output, shape index: {}]
  %s4 = sld [smem:[#allocation0]]
  $region45: #{tpu_custom_call.1} parent=0
    _
  %s6 = ssub.s32 1, %s4
  %s7 = scalar_select 0, %s6, %s4
  $region1: #{tpu_custom_call.1} parent=0
    #allocation2 [shape = 'u8[131072]{0}', space=vmem, size = 0x20000, scoped, tag = 'output window, operand 0']
    #allocation3 [shape = 's32[2]{0}', space=sflag, size = 0x8, scoped, tag = 'scoped memory for tpu_custom_call.1']
    %8 = vsyncpa [#allocation3], 0
    %s9 = scalar_lea.sflag [#allocation3], 1
    %10 = vsyncpa %s9, 0
    loop: start=0, step=1, limit=4
    $region2: #{tpu_custom_call.1} parent=1 // loop_pre_header
      _
    $region3: #{tpu_custom_call.1} parent=1 // loop_header
      %s12 = sphi 0, %s16
      %p13 = scmp.ge.s32.totalorder %s12, 4
      %s22 = sphi 0, %s24
      %s25 = sphi 0, %s22
      %s26 = sphi 0, %s25
      %s42 = sphi 0, %s26
      %s46 = sphi 0, %s46
      %s48 = sphi 0, %s46
      %s49 = sphi 0, %s48
      %s63 = sphi 0, %s49
      %s67 = sphi 0, %s67
      %s69 = sphi 0, %s67
      %s70 = sphi 0, %s69
      %s84 = sphi 0, %s70
      %s90 = sphi 0, %s92
      %s93 = sphi 0, %s90
      %s94 = sphi 0, %s93
      %s110 = sphi 0, %s94
    $region4: #{tpu_custom_call.1} parent=1 // loop_header_branch
      %15 = sbr.rel (%p13) target = $region8
    $region5: #{tpu_custom_call.1} parent=1 // loop_body
      %s17 = ssub.s32 %s12, 1
      %s18 = ssub.s32 %s12, 2
      %s19 = sadd.s32 %s12, 1
      %s20 = ssub.s32 %s12, %s19
      %p21 = scmp.eq.s32.totalorder %s20, 0
      %s23 = sadd.s32 %s22, 1
      %s24 = scalar_select %p21, %s22, %s23
      %p27 = pneg %p21
      %p28 = scmp.eq.s32.totalorder %s12, 1
      %p29 = por %p27, %p28
      %p30 = scmp.ne.s32.totalorder %s22, %s25
      %p31 = scmp.eq.s32.totalorder %s12, 0
      %p32 = por %p30, %p31
      %p33 = scmp.ne.s32.totalorder %s22, %s25
      %p34 = scmp.eq.s32.totalorder %s17, 1
      %p35 = por %p33, %p34
      %p36 = scmp.ne.s32.totalorder %s25, %s26
      %p37 = scmp.eq.s32.totalorder %s17, 0
      %p38 = por %p36, %p37
      %p39 = scmp.ne.s32.totalorder %s25, %s26
      %p40 = scmp.eq.s32.totalorder %s18, 1
      %p41 = por %p39, %p40
      %p43 = scmp.ne.s32.totalorder %s26, %s42
      %p44 = scmp.eq.s32.totalorder %s18, 0
      %p45 = por %p43, %p44
      %s47 = sadd.s32 %s46, 1
      %p50 = scmp.eq.s32.totalorder %s12, 1
      %p51 = scmp.ne.s32.totalorder %s46, %s48
      %p52 = scmp.eq.s32.totalorder %s12, 0
      %p53 = por %p51, %p52
      %p54 = scmp.ne.s32.totalorder %s46, %s48
      %p55 = scmp.eq.s32.totalorder %s17, 1
      %p56 = por %p54, %p55
      %p57 = scmp.ne.s32.totalorder %s48, %s49
      %p58 = scmp.eq.s32.totalorder %s17, 0
      %p59 = por %p57, %p58
      %p60 = scmp.ne.s32.totalorder %s48, %s49
      %p61 = scmp.eq.s32.totalorder %s18, 1
      %p62 = por %p60, %p61
      %p64 = scmp.ne.s32.totalorder %s49, %s63
      %p65 = scmp.eq.s32.totalorder %s18, 0
      %p66 = por %p64, %p65
      %s68 = sadd.s32 %s67, 1
      %p71 = scmp.eq.s32.totalorder %s12, 1
      %p72 = scmp.ne.s32.totalorder %s67, %s69
      %p73 = scmp.eq.s32.totalorder %s12, 0
      %p74 = por %p72, %p73
      %p75 = scmp.ne.s32.totalorder %s67, %s69
      %p76 = scmp.eq.s32.totalorder %s17, 1
      %p77 = por %p75, %p76
      %p78 = scmp.ne.s32.totalorder %s69, %s70
      %p79 = scmp.eq.s32.totalorder %s17, 0
      %p80 = por %p78, %p79
      %p81 = scmp.ne.s32.totalorder %s69, %s70
      %p82 = scmp.eq.s32.totalorder %s18, 1
      %p83 = por %p81, %p82
      %p85 = scmp.ne.s32.totalorder %s70, %s84
      %p86 = scmp.eq.s32.totalorder %s18, 0
      %p87 = por %p85, %p86
      %s88 = ssub.s32 %s12, %s19
      %p89 = scmp.eq.s32.totalorder %s88, 0
      %s91 = sadd.s32 %s90, 1
      %s92 = scalar_select %p89, %s90, %s91
      %p95 = pneg %p89
      %p96 = scmp.eq.s32.totalorder %s12, 1
      %p97 = por %p95, %p96
      %p98 = scmp.ne.s32.totalorder %s90, %s93
      %p99 = scmp.eq.s32.totalorder %s12, 0
      %p100 = por %p98, %p99
      %p101 = scmp.ne.s32.totalorder %s90, %s93
      %p102 = scmp.eq.s32.totalorder %s17, 1
      %p103 = por %p101, %p102
      %p104 = scmp.ne.s32.totalorder %s93, %s94
      %p105 = scmp.eq.s32.totalorder %s17, 0
      %p106 = por %p104, %p105
      %p107 = scmp.ne.s32.totalorder %s93, %s94
      %p108 = scmp.eq.s32.totalorder %s18, 1
      %p109 = por %p107, %p108
      %p111 = scmp.ne.s32.totalorder %s94, %s110
      %p112 = scmp.eq.s32.totalorder %s18, 0
      %p113 = por %p111, %p112
      %p114 = scmp.le.s32.totalorder 1, %s12
      %p115 = scmp.lt.s32.totalorder %s12, 3
      %p116 = pnand %p114, %p115
      %p117 = pneg %p116
      // Predicated region
      $region9: #{tpu_custom_call.1} parent=5 // pred_check
        _
      $region10: #{tpu_custom_call.1} parent=5 // pred_check_branch
        %119 = sbr.rel (%p116) target = $region12
      $region11: #{tpu_custom_call.1} parent=5 // pred_region
        %s120 = ssub.s32 %s12, 1
        // Predicated region
        $region13: #{tpu_custom_call.1} parent=11 // pred_check
          %p121 = pneg %p59
        $region14: #{tpu_custom_call.1} parent=11 // pred_check_branch
          %123 = sbr.rel (%p121) target = $region16
        $region15: #{tpu_custom_call.1} parent=11 // pred_region
          _
        $region16: #{tpu_custom_call.1} parent=11 // pred_fallthru
          _
        // Predicated region
        $region17: #{tpu_custom_call.1} parent=11 // pred_check
          %p124 = pneg %p80
        $region18: #{tpu_custom_call.1} parent=11 // pred_check_branch
          %126 = sbr.rel (%p124) target = $region20
        $region19: #{tpu_custom_call.1} parent=11 // pred_region
          _
        $region20: #{tpu_custom_call.1} parent=11 // pred_fallthru
          _
      $region12: #{tpu_custom_call.1} parent=5 // pred_fallthru
        _
      %p127 = scmp.lt.s32.totalorder %s12, 2
      // Predicated region
      $region21: #{tpu_custom_call.1} parent=5 // pred_check
        %p128 = pneg %p127
      $region22: #{tpu_custom_call.1} parent=5 // pred_check_branch
        %130 = sbr.rel (%p128) target = $region24
      $region23: #{tpu_custom_call.1} parent=5 // pred_region
        // Predicated region
        $region25: #{tpu_custom_call.1} parent=23 // pred_check
          %p131 = pneg %p32
        $region26: #{tpu_custom_call.1} parent=23 // pred_check_branch
          %133 = sbr.rel (%p131) target = $region28
        $region27: #{tpu_custom_call.1} parent=23 // pred_region
          %s134 = smul.u32 16, %s12
          %p135 = scmp.lt.s32.totalorder %s134, 31
          %s136 = scalar_select %p135, %s134, 31
          %s137 = smul.addr %s136, 8
          %s138 = scalar_lea.vmem %s0, %s137
          %s139 = smul.u32 16, %s12
        $region28: #{tpu_custom_call.1} parent=23 // pred_fallthru
          _
      $region24: #{tpu_custom_call.1} parent=5 // pred_fallthru
        _
      %p140 = scmp.le.s32.totalorder 1, %s12
      %p141 = scmp.lt.s32.totalorder %s12, 3
      %p142 = pnand %p140, %p141
      %p143 = pneg %p142
      // Predicated region
      $region29: #{tpu_custom_call.1} parent=5 // pred_check
        _
      $region30: #{tpu_custom_call.1} parent=5 // pred_check_branch
        %145 = sbr.rel (%p142) target = $region32
      $region31: #{tpu_custom_call.1} parent=5 // pred_region
        %s146 = ssub.s32 %s12, 1
        %s147 = smul.u32 16, %s17
        %p148 = scmp.lt.s32.totalorder %s147, 31
        %s149 = scalar_select %p148, %s147, 31
        %s150 = smul.addr %s149, 8
        %s151 = scalar_lea.vmem %s0, %s150
        %p152 = pneg %p38
        %p153 = pneg %p35
        %p154 = pneg %p59
        %p155 = pneg %p56
        %p156 = pneg %p80
        %p157 = pneg %p77
        %p158 = pneg %p106
        %p159 = pneg %p103
        %s160 = sand.u32 %s93, 1
        %s161 = scalar_lea.sflag [#allocation3], %s160
        %s162 = sand.u32 %s93, 1
        %s163 = smul.addr %s162, 128
        %s164 = scalar_lea.vmem [#allocation2], %s163
        %s165 = smul.u32 16, %s17
        %p166 = scmp.lt.s32.totalorder %s165, 31
        %s167 = scalar_select %p166, %s165, 31
        %s168 = smul.addr %s167, 8
        %s169 = scalar_lea.vmem %s0, %s168
        %s170 = smul.u32 16, %s17
        %s171 = smul.u32 16, %s17
        %v172 = vld [vmem:[%s169] sm:$0xff]
        %v173 = vld [vmem:[%s169 + $0x8] sm:$0xff]
        %v174 = vld [vmem:[%s169 + $0x10] sm:$0xff]
        %v175 = vld [vmem:[%s169 + $0x18] sm:$0xff]
        %v176 = vld [vmem:[%s169 + $0x20] sm:$0xff]
        %v177 = vld [vmem:[%s169 + $0x28] sm:$0xff]
        %v178 = vld [vmem:[%s169 + $0x30] sm:$0xff]
        %v179 = vld [vmem:[%s169 + $0x38] sm:$0xff]
        %v180 = vld [vmem:[%s169 + $0x40] sm:$0xff]
        %v181 = vld [vmem:[%s169 + $0x48] sm:$0xff]
        %v182 = vld [vmem:[%s169 + $0x50] sm:$0xff]
        %v183 = vld [vmem:[%s169 + $0x58] sm:$0xff]
        %v184 = vld [vmem:[%s169 + $0x60] sm:$0xff]
        %v185 = vld [vmem:[%s169 + $0x68] sm:$0xff]
        %v186 = vld [vmem:[%s169 + $0x70] sm:$0xff]
        %v187 = vld [vmem:[%s169 + $0x78] sm:$0xff]
        %v188 = vld [vmem:[%s1] sm:$0xff]
        %v189 = vld [vmem:[%s1 + $0x8] sm:$0xff]
        %v190 = vld [vmem:[%s1 + $0x10] sm:$0xff]
        %v191 = vld [vmem:[%s1 + $0x18] sm:$0xff]
        %v192 = vld [vmem:[%s2] sm:$0x1]
        %v194 = vlaneseq
        %v195 = vshrl.u32 %v194, 7
        %v196 = vsub.s32 0, %v195
        %v197 = vrot.slane %v192, %v196
        %vm199 = vcmask 261120
        %v201 = vsel %vm199, %v172, 0
        %v204 = vsel %vm199, %v173, 0
        %v207 = vsel %vm199, %v174, 0
        %v210 = vsel %vm199, %v175, 0
        %v213 = vsel %vm199, %v176, 0
        %v216 = vsel %vm199, %v177, 0
        %v219 = vsel %vm199, %v178, 0
        %v222 = vsel %vm199, %v179, 0
        %v225 = vsel %vm199, %v180, 0
        %v228 = vsel %vm199, %v181, 0
        %v231 = vsel %vm199, %v182, 0
        %v234 = vsel %vm199, %v183, 0
        %v237 = vsel %vm199, %v184, 0
        %v240 = vsel %vm199, %v185, 0
        %v243 = vsel %vm199, %v186, 0
        %v246 = vsel %vm199, %v187, 0
        %248 = vmatprep.subr.mxu0 0.0
        %249 = vmatpush1.msra.mxu0 %v188
        %250 = vmatprep.subr.mxu0 0.0
        %251 = vmatpush1.msra.mxu0 %v189
        %252 = vmatprep.subr.mxu0 0.0
        %253 = vmatpush1.msra.mxu0 %v190
        %254 = vmatprep.subr.mxu0 0.0
        %255 = vmatpush1.msra.mxu0 %v191
        %256 = vmatprep.subr.mxu0 0.0
        %257 = vmatpush1.msra.mxu0 0.0
        %258 = vmatprep.subr.mxu0 0.0
        %259 = vmatpush1.msra.mxu0 0.0
        %260 = vmatprep.subr.mxu0 0.0
        %261 = vmatpush1.msra.mxu0 0.0
        %262 = vmatprep.subr.mxu0 0.0
        %263 = vmatpush1.msra.mxu0 0.0
        %264 = vmatprep.subr.mxu0 0.0
        %265 = vmatpush1.msra.mxu0 0.0
        %266 = vmatprep.subr.mxu0 0.0
        %267 = vmatpush1.msra.mxu0 0.0
        %268 = vmatprep.subr.mxu0 0.0
        %269 = vmatpush1.msra.mxu0 0.0
        %270 = vmatprep.subr.mxu0 0.0
        %271 = vmatpush1.msra.mxu0 0.0
        %272 = vmatprep.subr.mxu0 0.0
        %273 = vmatpush1.msra.mxu0 0.0
        %274 = vmatprep.subr.mxu0 0.0
        %275 = vmatpush1.msra.mxu0 0.0
        %276 = vmatprep.subr.mxu0 0.0
        %277 = vmatpush1.msra.mxu0 0.0
        %278 = vmatprep.subr.mxu0 0.0
        %279 = vmatpush1.msra.mxu0 0.0
        %280 = vmatprep.subr.mxu0 0.0
        %281 = vmatpush1.msra.mxu0 0.0
        %282 = vmatprep.subr.mxu0 0.0
        %283 = vmatpush1.msra.mxu0 0.0
        %284 = vmatprep.subr.mxu0 0.0
        %285 = vmatpush1.msra.mxu0 0.0
        %286 = vmatprep.subr.mxu0 0.0
        %287 = vmatpush1.msra.mxu0 0.0
        %288 = vmatprep.subr.mxu0 0.0
        %289 = vmatpush1.msra.mxu0 0.0
        %290 = vmatprep.subr.mxu0 0.0
        %291 = vmatpush1.msra.mxu0 0.0
        %292 = vmatprep.subr.mxu0 0.0
        %293 = vmatpush1.msra.mxu0 0.0
        %294 = vmatprep.subr.mxu0 0.0
        %295 = vmatpush1.msra.mxu0 0.0
        %296 = vmatprep.subr.mxu0 0.0
        %297 = vmatpush1.msra.mxu0 0.0
        %298 = vmatprep.subr.mxu0 0.0
        %299 = vmatpush1.msra.mxu0 0.0
        %300 = vmatprep.subr.mxu0 0.0
        %301 = vmatpush1.msra.mxu0 0.0
        %302 = vmatprep.subr.mxu0 0.0
        %303 = vmatpush1.msra.mxu0 0.0
        %304 = vmatprep.subr.mxu0 0.0
        %305 = vmatpush1.msra.mxu0 0.0
        %306 = vmatprep.subr.mxu0 0.0
        %307 = vmatpush1.msra.mxu0 0.0
        %308 = vmatprep.subr.mxu0 0.0
        %309 = vmatpush1.msra.mxu0 0.0
        %310 = vmatprep.subr.mxu0 0.0
        %311 = vmatpush1.msra.mxu0 0.0
        %312 = vmatprep.mubr.f32.mxu0 0.0
        %313 = vmatmul.mubr.f32.gmra.mrb[0].mxu0 %v201
        %v314 = vpop.f32.mrb[0].mxu0
        %v315 = vadd.f32 %v197, %v314
        %v316 = vpop.f32.mrb[0].mxu0
        %317 = vmatprep.mubr.f32.mxu0 0.0
        %318 = vmatmul.mubr.f32.gmra.mrb[0].mxu0 %v204
        %v319 = vpop.f32.mrb[0].mxu0
        %v320 = vadd.f32 %v197, %v319
        %v321 = vpop.f32.mrb[0].mxu0
        %322 = vmatprep.mubr.f32.mxu0 0.0
        %323 = vmatmul.mubr.f32.gmra.mrb[0].mxu0 %v207
        %v324 = vpop.f32.mrb[0].mxu0
        %v325 = vadd.f32 %v197, %v324
        %v326 = vpop.f32.mrb[0].mxu0
        %327 = vmatprep.mubr.f32.mxu0 0.0
        %328 = vmatmul.mubr.f32.gmra.mrb[0].mxu0 %v210
        %v329 = vpop.f32.mrb[0].mxu0
        %v330 = vadd.f32 %v197, %v329
        %v331 = vpop.f32.mrb[0].mxu0
        %332 = vmatprep.mubr.f32.mxu0 0.0
        %333 = vmatmul.mubr.f32.gmra.mrb[0].mxu0 %v213
        %v334 = vpop.f32.mrb[0].mxu0
        %v335 = vadd.f32 %v197, %v334
        %v336 = vpop.f32.mrb[0].mxu0
        %337 = vmatprep.mubr.f32.mxu0 0.0
        %338 = vmatmul.mubr.f32.gmra.mrb[0].mxu0 %v216
        %v339 = vpop.f32.mrb[0].mxu0
        %v340 = vadd.f32 %v197, %v339
        %v341 = vpop.f32.mrb[0].mxu0
        %342 = vmatprep.mubr.f32.mxu0 0.0
        %343 = vmatmul.mubr.f32.gmra.mrb[0].mxu0 %v219
        %v344 = vpop.f32.mrb[0].mxu0
        %v345 = vadd.f32 %v197, %v344
        %v346 = vpop.f32.mrb[0].mxu0
        %347 = vmatprep.mubr.f32.mxu0 0.0
        %348 = vmatmul.mubr.f32.gmra.mrb[0].mxu0 %v222
        %v349 = vpop.f32.mrb[0].mxu0
        %v350 = vadd.f32 %v197, %v349
        %v351 = vpop.f32.mrb[0].mxu0
        %352 = vmatprep.mubr.f32.mxu0 0.0
        %353 = vmatmul.mubr.f32.gmra.mrb[0].mxu0 %v225
        %v354 = vpop.f32.mrb[0].mxu0
        %v355 = vadd.f32 %v197, %v354
        %v356 = vpop.f32.mrb[0].mxu0
        %357 = vmatprep.mubr.f32.mxu0 0.0
        %358 = vmatmul.mubr.f32.gmra.mrb[0].mxu0 %v228
        %v359 = vpop.f32.mrb[0].mxu0
        %v360 = vadd.f32 %v197, %v359
        %v361 = vpop.f32.mrb[0].mxu0
        %362 = vmatprep.mubr.f32.mxu0 0.0
        %363 = vmatmul.mubr.f32.gmra.mrb[0].mxu0 %v231
        %v364 = vpop.f32.mrb[0].mxu0
        %v365 = vadd.f32 %v197, %v364
        %v366 = vpop.f32.mrb[0].mxu0
        %367 = vmatprep.mubr.f32.mxu0 0.0
        %368 = vmatmul.mubr.f32.gmra.mrb[0].mxu0 %v234
        %v369 = vpop.f32.mrb[0].mxu0
        %v370 = vadd.f32 %v197, %v369
        %v371 = vpop.f32.mrb[0].mxu0
        %372 = vmatprep.mubr.f32.mxu0 0.0
        %373 = vmatmul.mubr.f32.gmra.mrb[0].mxu0 %v237
        %v374 = vpop.f32.mrb[0].mxu0
        %v375 = vadd.f32 %v197, %v374
        %v376 = vpop.f32.mrb[0].mxu0
        %377 = vmatprep.mubr.f32.mxu0 0.0
        %378 = vmatmul.mubr.f32.gmra.mrb[0].mxu0 %v240
        %v379 = vpop.f32.mrb[0].mxu0
        %v380 = vadd.f32 %v197, %v379
        %v381 = vpop.f32.mrb[0].mxu0
        %382 = vmatprep.mubr.f32.mxu0 0.0
        %383 = vmatmul.mubr.f32.gmra.mrb[0].mxu0 %v243
        %v384 = vpop.f32.mrb[0].mxu0
        %v385 = vadd.f32 %v197, %v384
        %v386 = vpop.f32.mrb[0].mxu0
        %387 = vmatprep.mubr.f32.mxu0 0.0
        %388 = vmatmul.mubr.f32.gmra.mrb[0].mxu0 %v246
        %v389 = vpop.f32.mrb[0].mxu0
        %v390 = vadd.f32 %v197, %v389
        %v391 = vpop.f32.mrb[0].mxu0
        %392 = vdwg.mxu0
        %393 = vst [vmem:[%s164] sm:$0xff] %v315
        %394 = vst [vmem:[%s164 + $0x8] sm:$0xff] %v320
        %395 = vst [vmem:[%s164 + $0x10] sm:$0xff] %v325
        %396 = vst [vmem:[%s164 + $0x18] sm:$0xff] %v330
        %397 = vst [vmem:[%s164 + $0x20] sm:$0xff] %v335
        %398 = vst [vmem:[%s164 + $0x28] sm:$0xff] %v340
        %399 = vst [vmem:[%s164 + $0x30] sm:$0xff] %v345
        %400 = vst [vmem:[%s164 + $0x38] sm:$0xff] %v350
        %401 = vst [vmem:[%s164 + $0x40] sm:$0xff] %v355
        %402 = vst [vmem:[%s164 + $0x48] sm:$0xff] %v360
        %403 = vst [vmem:[%s164 + $0x50] sm:$0xff] %v365
        %404 = vst [vmem:[%s164 + $0x58] sm:$0xff] %v370
        %405 = vst [vmem:[%s164 + $0x60] sm:$0xff] %v375
        %406 = vst [vmem:[%s164 + $0x68] sm:$0xff] %v380
        %407 = vst [vmem:[%s164 + $0x70] sm:$0xff] %v385
        %408 = vst [vmem:[%s164 + $0x78] sm:$0xff] %v390
        %s409 = sand.u32 %s93, 1
        %s410 = scalar_lea.sflag [#allocation3], %s409
        %s411 = sand.u32 %s93, 1
        %s412 = smul.addr %s411, 128
        %s413 = scalar_lea.vmem [#allocation2], %s412
        // Predicated region
        $region33: #{tpu_custom_call.1} parent=31 // pred_check
          %p414 = pneg %p103
        $region34: #{tpu_custom_call.1} parent=31 // pred_check_branch
          %416 = sbr.rel (%p414) target = $region36
        $region35: #{tpu_custom_call.1} parent=31 // pred_region
          %s417 = smul.u32 16, %s17
          %s419 = ssub.s32 2048, 2048
          %420 = vsyncadd %s410, %s419
          %s421 = smul.addr %s417, 128
          %s422 = scalar_lea.hbm %s3, %s421
          %s423 = sshll.u32 %s413, 4
          %s424 = int_to_ptr.vmem [resolvable:$true] %s423
          %429 = dma.vmem_to_hbm [thread:$0]  %s424, 2048, %s422, %s410, 128, 128, 8
        $region36: #{tpu_custom_call.1} parent=31 // pred_fallthru
          _
      $region32: #{tpu_custom_call.1} parent=5 // pred_fallthru
        _
      %p430 = scmp.le.s32.totalorder 2, %s12
      // Predicated region
      $region37: #{tpu_custom_call.1} parent=5 // pred_check
        %p431 = pneg %p430
      $region38: #{tpu_custom_call.1} parent=5 // pred_check_branch
        %433 = sbr.rel (%p431) target = $region40
      $region39: #{tpu_custom_call.1} parent=5 // pred_region
        %s434 = ssub.s32 %s12, 2
        // Predicated region
        $region41: #{tpu_custom_call.1} parent=39 // pred_check
          %p435 = pneg %p109
        $region42: #{tpu_custom_call.1} parent=39 // pred_check_branch
          %437 = sbr.rel (%p435) target = $region44
        $region43: #{tpu_custom_call.1} parent=39 // pred_region
          %s438 = sand.u32 %s94, 1
          %s439 = scalar_lea.sflag [#allocation3], %s438
          %s440 = sand.u32 %s94, 1
          %s441 = smul.addr %s440, 128
          %s442 = scalar_lea.vmem [#allocation2], %s441
          %443 = dma.done %s439, 2048
        $region44: #{tpu_custom_call.1} parent=39 // pred_fallthru
          _
      $region40: #{tpu_custom_call.1} parent=5 // pred_fallthru
        _
    $region6: #{tpu_custom_call.1} parent=1 // loop_footer
      %s16 = sadd.s32 1, %s12
    $region7: #{tpu_custom_call.1} parent=1 // loop_footer_branch
      %11 = sbr.rel target = $region3
    $region8: #{tpu_custom_call.1} parent=1 // loop_exit
      _
    %444 = vsyncpa [#allocation3], 1
    %s445 = scalar_lea.sflag [#allocation3], 1
    %446 = vsyncpa %s445, 1

</llo_original>
